<compile_context>
chip_gen: v6e
topology: v6e:2x2x1
jax: 0.10.0
libtpu: 0.0.40
codegen_flags: <defaults>
</compile_context>

<pallas_src>
import jax
import jax.numpy as jnp
from jax import lax
from jax.experimental import pallas as pl
from jax.experimental.pallas import tpu as pltpu


# ---------------------------------------------------------------------------
# Kernel 1: full GINE encoder (all layers fused), grid = (num_layer,)
# ---------------------------------------------------------------------------
def _gine_encoder_kernel(h0_ref, src_ref, dst_ref,
                         eemb_ref, eps_ref, w1_ref, b1_ref, w2_ref, b2_ref,
                         o_ref):
    l = pl.program_id(0)
    num_layer = pl.num_programs(0)

    # Layer 0: seed the resident node-feature block with the atom embeddings.
    @pl.when(l == 0)
    def _():
        o_ref[...] = h0_ref[...]

    x = o_ref[...]                                    # [Np, Dp] f32, VMEM resident
    e_pad = src_ref.shape[0]
    n_pad = x.shape[0]
    x_bf = x.astype(jnp.bfloat16)

    # Gather x_j[e] = x[src[e]]  ==  onehot(src) @ x (one-hot built in-register,
    # exact 0/1 values in bf16, f32 accumulation on the MXU).
    col_ids = lax.broadcasted_iota(jnp.int32, (e_pad, n_pad), 1)
    gth = jnp.where(src_ref[...] == col_ids, 1.0, 0.0).astype(jnp.bfloat16)
    x_j = jnp.dot(gth, x_bf, preferred_element_type=jnp.float32)       # [Ep, Dp]

    # message: relu(x_j + bond_embedding)
    msg = jnp.maximum(x_j + eemb_ref[0], 0.0)

    # aggr='add' scatter over destination nodes: agg = onehot(dst)^T @ msg
    row_ids = lax.broadcasted_iota(jnp.int32, (n_pad, e_pad), 0)
    sct = jnp.where(dst_ref[...] == row_ids, 1.0, 0.0).astype(jnp.bfloat16)
    agg = jnp.dot(sct, msg.astype(jnp.bfloat16),
                  preferred_element_type=jnp.float32)                  # [Np, Dp]

    # GINE update + MLP. BatchNorms (eval) and biases are pre-folded into
    # w1'/b1'/w2'/b2' host-side, so the epilogue is just bias-add + ReLU.
    h = (1.0 + eps_ref[0]) * x + agg
    h = jnp.dot(h.astype(jnp.bfloat16), w1_ref[0],
                preferred_element_type=jnp.float32) + b1_ref[0]
    h = jnp.maximum(h, 0.0)
    h = jnp.dot(h.astype(jnp.bfloat16), w2_ref[0],
                preferred_element_type=jnp.float32) + b2_ref[0]

    # ReLU for all but the last layer; Dropout is identity in eval mode.
    @pl.when(l < num_layer - 1)
    def _():
        o_ref[...] = jnp.maximum(h, 0.0)

    @pl.when(l == num_layer - 1)
    def _():
        o_ref[...] = h


def gine_encoder(h0, src_col, dst_row, edge_emb, eps_b, w1, b1, w2, b2):
    n_pad, d_pad = h0.shape
    num_layer, e_pad, _ = edge_emb.shape
    h_pad = w1.shape[2]
    return pl.pallas_call(
        _gine_encoder_kernel,
        out_shape=jax.ShapeDtypeStruct((n_pad, d_pad), jnp.float32),
        grid=(num_layer,),
        in_specs=[
            pl.BlockSpec((n_pad, d_pad), lambda l: (0, 0)),        # h0 (loaded once)
            pl.BlockSpec((e_pad, 1), lambda l: (0, 0)),            # src (column)
            pl.BlockSpec((1, e_pad), lambda l: (0, 0)),            # dst (row)
            pl.BlockSpec((1, e_pad, d_pad), lambda l: (l, 0, 0)),  # bond emb / layer
            pl.BlockSpec((1, 1, d_pad), lambda l: (l, 0, 0)),      # eps (broadcast)
            pl.BlockSpec((1, d_pad, h_pad), lambda l: (l, 0, 0)),  # w1' (bf16)
            pl.BlockSpec((1, 1, h_pad), lambda l: (l, 0, 0)),      # b1'
            pl.BlockSpec((1, h_pad, d_pad), lambda l: (l, 0, 0)),  # w2' (bf16)
            pl.BlockSpec((1, 1, d_pad), lambda l: (l, 0, 0)),      # b2'
        ],
        out_specs=pl.BlockSpec((n_pad, d_pad), lambda l: (0, 0)),   # resident carry
        compiler_params=pltpu.CompilerParams(
            dimension_semantics=("arbitrary",),      # layers are sequential
            vmem_limit_bytes=48 * 1024 * 1024,       # fits v7x's 64 MiB VMEM too
        ),
    )(h0, src_col, dst_row, edge_emb, eps_b, w1, b1, w2, b2)


# ---------------------------------------------------------------------------
# Kernel 2: masker head — node/edge attention + sigmoid + reg_mask scatter-adds
# ---------------------------------------------------------------------------
def _masker_head_kernel(nrep_ref, src_ref, dst_ref, nbatch_ref, ebatch_ref,
                        wn_ref, wa_ref, wb_ref, bias_ref,
                        node_key_ref, edge_key_ref,
                        nkey_num_ref, nenv_num_ref, nratio_ref,
                        ekey_num_ref, eenv_num_ref, eratio_ref):
    nr = nrep_ref[...]                                   # [Np, Dp] f32
    n_pad, _ = nr.shape
    e_pad = src_ref.shape[0]
    g_num = nkey_num_ref.shape[0]

    # node_key = sigmoid(node_att_mlp(node_rep))
    node_key = jax.nn.sigmoid(
        jnp.sum(nr * wn_ref[...], axis=-1, keepdims=True) + bias_ref[0])
    node_key_ref[...] = node_key

    # edge_rep = cat([node_rep[row], node_rep[col]]); gathers via in-register one-hot
    col_ids = lax.broadcasted_iota(jnp.int32, (e_pad, n_pad), 1)
    g_src = jnp.where(src_ref[...] == col_ids, 1.0, 0.0)
    g_dst = jnp.where(dst_ref[...] == col_ids, 1.0, 0.0)
    h_src = jnp.dot(g_src, nr, preferred_element_type=jnp.float32)
    h_dst = jnp.dot(g_dst, nr, preferred_element_type=jnp.float32)
    edge_key = jax.nn.sigmoid(
        jnp.sum(h_src * wa_ref[...], axis=-1, keepdims=True)
        + jnp.sum(h_dst * wb_ref[...], axis=-1, keepdims=True) + bias_ref[1])
    edge_key_ref[...] = edge_key

    # reg_mask: per-graph scatter_add via exact one-hot over the batch vector.
    # Padded rows carry segment id -1 and are therefore excluded.
    def _reg(mask, seg_row, key_ref, env_ref, ratio_ref):
        m = mask.shape[0]
        seg_ids = lax.broadcasted_iota(jnp.int32, (g_num, m), 0)
        b = jnp.where(seg_row == seg_ids, 1.0, 0.0)                    # [G, m]
        key_ref[...] = jnp.dot(b, mask, preferred_element_type=jnp.float32) + 1e-8
        env_ref[...] = jnp.dot(b, 1.0 - mask,
                               preferred_element_type=jnp.float32) + 1e-8
        nonzero = jnp.dot(b, (mask > 0).astype(jnp.float32),
                          preferred_element_type=jnp.float32)
        allm = jnp.dot(b, jnp.ones_like(mask), preferred_element_type=jnp.float32)
        ratio_ref[...] = nonzero / (allm + 1e-8)

    _reg(node_key, nbatch_ref[...], nkey_num_ref, nenv_num_ref, nratio_ref)
    _reg(edge_key, ebatch_ref[...], ekey_num_ref, eenv_num_ref, eratio_ref)


def masker_head(node_rep, src_col, dst_col, nbatch_row, ebatch_row,
                wn, wa, wb, bias2, num_graphs):
    n_pad, _ = node_rep.shape
    e_pad = src_col.shape[0]
    vmem = pl.BlockSpec(memory_space=pltpu.MemorySpace.VMEM)
    smem = pl.BlockSpec(memory_space=pltpu.MemorySpace.SMEM)
    g1 = jax.ShapeDtypeStruct((num_graphs, 1), jnp.float32)
    return pl.pallas_call(
        _masker_head_kernel,
        out_shape=(jax.ShapeDtypeStruct((n_pad, 1), jnp.float32),
                   jax.ShapeDtypeStruct((e_pad, 1), jnp.float32),
                   g1, g1, g1, g1, g1, g1),
        in_specs=[vmem, vmem, vmem, vmem, vmem, vmem, vmem, vmem, smem],
        out_specs=(vmem,) * 8,
    )(node_rep, src_col, dst_col, nbatch_row, ebatch_row, wn, wa, wb, bias2)


# ---------------------------------------------------------------------------
# Host-side glue: embedding lookups, padding, BN folding, output assembly
# ---------------------------------------------------------------------------
def _round_up(v, m):
    return ((v + m - 1) // m) * m


def _pad2(a, rows, cols):
    return jnp.pad(a, ((0, rows - a.shape[0]), (0, cols - a.shape[1])))


def graph_mol_masker(x_atoms, edge_index, edge_attr, batch, num_graphs, params):
    atom_tables = params["atom_tables"]
    layers = params["layers"]
    D = atom_tables[0].shape[1]
    N = x_atoms.shape[0]
    E = edge_attr.shape[0]

    d_pad = _round_up(D, 128)            # lane-dense emb dim
    h_pad = _round_up(2 * D, 128)        # lane-dense MLP hidden dim
    n_pad = _round_up(N, 8)
    e_pad = _round_up(E, 8)

    # AtomEncoder: sum of per-feature embedding lookups (gather glue) -> [N, D]
    h0 = jnp.zeros((N, D), jnp.float32)
    for f, tbl in enumerate(atom_tables):
        h0 = h0 + tbl[x_atoms[:, f]]
    h0 = _pad2(h0, n_pad, d_pad)

    # Per-layer params: BondEncoder lookups + eval-BatchNorm folding into weights.
    eemb_l, eps_l, w1_l, b1_l, w2_l, b2_l = [], [], [], [], [], []
    for p in layers:
        ee = jnp.zeros((E, D), jnp.float32)
        for f, tbl in enumerate(p["bond_tables"]):
            ee = ee + tbl[edge_attr[:, f]]
        eemb_l.append(_pad2(ee, e_pad, d_pad))
        s1 = p["g1"] / jnp.sqrt(p["rv1"] + 1e-5)
        t1 = p["be1"] - p["rm1"] * s1
        s2 = p["g2"] / jnp.sqrt(p["rv2"] + 1e-5)
        t2 = p["be2"] - p["rm2"] * s2
        w1_l.append(_pad2(p["w1"] * s1, d_pad, h_pad))        # Linear+BN fold
        b1_l.append(_pad2(p["b1"] * s1 + t1, 1, h_pad))
        w2_l.append(_pad2(p["w2"] * s2, h_pad, d_pad))        # Linear+outer-BN fold
        b2_l.append(_pad2(p["b2"] * s2 + t2, 1, d_pad))
        eps_l.append(jnp.broadcast_to(p["eps"].reshape(1, 1), (1, d_pad)))

    edge_emb = jnp.stack(eemb_l)                              # [L, Ep, Dp] f32
    eps_b = jnp.stack(eps_l)                                  # [L, 1, Dp]  f32
    w1_st = jnp.stack(w1_l).astype(jnp.bfloat16)              # [L, Dp, Hp]
    b1_st = jnp.stack(b1_l)                                   # [L, 1, Hp]  f32
    w2_st = jnp.stack(w2_l).astype(jnp.bfloat16)              # [L, Hp, Dp]
    b2_st = jnp.stack(b2_l)                                   # [L, 1, Dp]  f32

    # Edge index vectors; padded edges get index -1 -> all-zero one-hot rows.
    src, dst = edge_index[0], edge_index[1]       # PyG: row 0 = source, row 1 = target
    src_p = jnp.full((e_pad,), -1, jnp.int32).at[:E].set(src)
    dst_p = jnp.full((e_pad,), -1, jnp.int32).at[:E].set(dst)
    src_col = src_p.reshape(e_pad, 1)
    dst_row = dst_p.reshape(1, e_pad)

    # ---- GINE encoder (single fused Pallas kernel over all layers) ----
    node_rep_p = gine_encoder(h0, src_col, dst_row, edge_emb, eps_b,
                              w1_st, b1_st, w2_st, b2_st)     # [Np, Dp]

    # ---- Masker head ----
    dst_col = dst_p.reshape(e_pad, 1)
    nbatch = jnp.full((n_pad,), -1, jnp.int32).at[:N].set(batch).reshape(1, n_pad)
    ebatch = jnp.full((e_pad,), -1, jnp.int32).at[:E].set(batch[src]).reshape(1, e_pad)
    wn = _pad2(params["node_att_w"][None, :], 1, d_pad)
    wa = _pad2(params["edge_att_w"][None, :D], 1, d_pad)
    wb = _pad2(params["edge_att_w"][None, D:], 1, d_pad)
    bias2 = jnp.stack([params["node_att_b"], params["edge_att_b"]]).astype(jnp.float32)

    (node_key_p, edge_key_p,
     node_key_num, node_env_num, non_zero_node_ratio,
     edge_key_num, edge_env_num, non_zero_edge_ratio) = masker_head(
        node_rep_p, src_col, dst_col, nbatch, ebatch, wn, wa, wb, bias2, num_graphs)

    return {
        "node_key": node_key_p[:N],
        "edge_key": edge_key_p[:E],
        "node_key_num": node_key_num,
        "node_env_num": node_env_num,
        "edge_key_num": edge_key_num,
        "edge_env_num": edge_env_num,
        # stored as module attributes in the PyTorch reference:
        "non_zero_node_ratio": non_zero_node_ratio,
        "non_zero_edge_ratio": non_zero_edge_ratio,
    }


# ---------------------------------------------------------------------------
# Deterministic parameter init (mirrors the PyTorch module's parameter set)
# ---------------------------------------------------------------------------
def init_params(key, num_layer, emb_dim, num_atom_feats=9, num_bond_feats=3,
                atom_vocab=16, bond_vocab=8):
    keys = iter(jax.random.split(key, 256))
    D = emb_dim
    atom_tables = [jax.random.normal(next(keys), (atom_vocab, D), jnp.float32) * 0.1
                   for _ in range(num_atom_feats)]
    layers = []
    for _ in range(num_layer):
        p = {}
        p["bond_tables"] = [jax.random.normal(next(keys), (bond_vocab, D), jnp.float32) * 0.1
                            for _ in range(num_bond_feats)]
        p["eps"] = jnp.zeros((1,), jnp.float32)    # torch.nn.Parameter(torch.Tensor([0]))
        p["w1"] = jax.random.normal(next(keys), (D, 2 * D), jnp.float32) * 0.1
        p["b1"] = jax.random.normal(next(keys), (1, 2 * D), jnp.float32) * 0.01
        p["g1"] = 1.0 + jax.random.normal(next(keys), (1, 2 * D), jnp.float32) * 0.1
        p["be1"] = jax.random.normal(next(keys), (1, 2 * D), jnp.float32) * 0.01
        p["rm1"] = jax.random.normal(next(keys), (1, 2 * D), jnp.float32) * 0.01
        p["rv1"] = 1.0 + jnp.abs(jax.random.normal(next(keys), (1, 2 * D), jnp.float32)) * 0.1
        p["w2"] = jax.random.normal(next(keys), (2 * D, D), jnp.float32) * 0.1
        p["b2"] = jax.random.normal(next(keys), (1, D), jnp.float32) * 0.01
        p["g2"] = 1.0 + jax.random.normal(next(keys), (1, D), jnp.float32) * 0.1
        p["be2"] = jax.random.normal(next(keys), (1, D), jnp.float32) * 0.01
        p["rm2"] = jax.random.normal(next(keys), (1, D), jnp.float32) * 0.01
        p["rv2"] = 1.0 + jnp.abs(jax.random.normal(next(keys), (1, D), jnp.float32)) * 0.1
        layers.append(p)
    return {
        "atom_tables": atom_tables,
        "layers": layers,
        "node_att_w": jax.random.normal(next(keys), (D,), jnp.float32) * 0.1,
        "node_att_b": jax.random.normal(next(keys), (), jnp.float32) * 0.01,
        "edge_att_w": jax.random.normal(next(keys), (2 * D,), jnp.float32) * 0.1,
        "edge_att_b": jax.random.normal(next(keys), (), jnp.float32) * 0.01,
    }


if __name__ == "__main__":
    key = jax.random.PRNGKey(0)
    N, E, D = 32, 64, 32          # nodes, edges, emb_dim
    NUM_LAYER, NUM_GRAPHS = 3, 2

    k_param, k_x, k_ea, k_src, k_dst = jax.random.split(key, 5)
    params = init_params(k_param, NUM_LAYER, D)

    x_atoms = jax.random.randint(k_x, (N, 9), 0, 16, dtype=jnp.int32)      # atom feats
    edge_attr = jax.random.randint(k_ea, (E, 3), 0, 8, dtype=jnp.int32)    # bond feats
    src = jax.random.randint(k_src, (E,), 0, N, dtype=jnp.int32)
    dst = jax.random.randint(k_dst, (E,), 0, N, dtype=jnp.int32)
    edge_index = jnp.stack([src, dst], axis=0)                             # [2, E]
    batch = jnp.repeat(jnp.arange(NUM_GRAPHS, dtype=jnp.int32), N // NUM_GRAPHS)

    # size = batch[-1].item() + 1 in the reference (a static Python int here).
    size = int(batch[-1]) + 1

    out = graph_mol_masker(x_atoms, edge_index, edge_attr, batch, size, params)
    out = jax.block_until_ready(out)

    assert out["node_key"].shape == (N, 1) and out["node_key"].dtype == jnp.float32
    assert out["edge_key"].shape == (E, 1)
    assert out["node_key_num"].shape == (size, 1)
    assert out["edge_env_num"].shape == (size, 1)
    print("KERNEL_OK")
</pallas_src>

<mosaic_0001>
module attributes {stable_mosaic.version = 11 : i64} {
  func.func @_gine_encoder_kernel(%arg0: i32, %arg1: memref<32x128xf32, #tpu.memory_space<vmem>>, %arg2: memref<64x1xi32, #tpu.memory_space<vmem>>, %arg3: memref<1x64xi32, #tpu.memory_space<vmem>>, %arg4: memref<1x64x128xf32, #tpu.memory_space<vmem>>, %arg5: memref<1x1x128xf32, #tpu.memory_space<vmem>>, %arg6: memref<1x128x128xbf16, #tpu.memory_space<vmem>>, %arg7: memref<1x1x128xf32, #tpu.memory_space<vmem>>, %arg8: memref<1x128x128xbf16, #tpu.memory_space<vmem>>, %arg9: memref<1x1x128xf32, #tpu.memory_space<vmem>>, %arg10: memref<32x128xf32, #tpu.memory_space<vmem>>) attributes {dimension_semantics = [#tpu.dimension_semantics<arbitrary>], iteration_bounds = array<i64: 3>, scalar_prefetch = 0 : i64, scratch_operands = 0 : i64, tpu.core_type = #tpu.core_type<tc>, window_params = [{pipeline_mode = #tpu.pipeline_mode<synchronous>, transform_indices = @transform_0, window_bounds = array<i64: 32, 128>}, {pipeline_mode = #tpu.pipeline_mode<synchronous>, transform_indices = @transform_1, window_bounds = array<i64: 64, 1>}, {pipeline_mode = #tpu.pipeline_mode<synchronous>, transform_indices = @transform_2, window_bounds = array<i64: 1, 64>}, {transform_indices = @transform_3, window_bounds = array<i64: 1, 64, 128>}, {transform_indices = @transform_4, window_bounds = array<i64: 1, 1, 128>}, {transform_indices = @transform_5, window_bounds = array<i64: 1, 128, 128>}, {transform_indices = @transform_6, window_bounds = array<i64: 1, 1, 128>}, {transform_indices = @transform_7, window_bounds = array<i64: 1, 128, 128>}, {transform_indices = @transform_8, window_bounds = array<i64: 1, 1, 128>}, {pipeline_mode = #tpu.pipeline_mode<synchronous>, transform_indices = @transform_9, window_bounds = array<i64: 32, 128>}]} {
    %c0_i32 = arith.constant 0 : i32
    %0 = arith.cmpi eq, %arg0, %c0_i32 : i32
    %1 = arith.extui %0 : i1 to i32
    %c0_i32_0 = arith.constant 0 : i32
    %2 = arith.cmpi ne, %1, %c0_i32_0 : i32
    scf.if %2 {
      %c0_37 = arith.constant 0 : index
      %c0_38 = arith.constant 0 : index
      %60 = vector.load %arg1[%c0_37, %c0_38] : memref<32x128xf32, #tpu.memory_space<vmem>>, vector<32x128xf32>
      %c0_39 = arith.constant 0 : index
      %c0_40 = arith.constant 0 : index
      %61 = vector.load %arg10[%c0_39, %c0_40] : memref<32x128xf32, #tpu.memory_space<vmem>>, vector<32x128xf32>
      tpu.vector_store %arg10[%c0_39, %c0_40], %60 {strides = array<i32>} : memref<32x128xf32, #tpu.memory_space<vmem>>, vector<32x128xf32>,
    } else {
    }
    %c0 = arith.constant 0 : index
    %c0_1 = arith.constant 0 : index
    %3 = vector.load %arg10[%c0, %c0_1] : memref<32x128xf32, #tpu.memory_space<vmem>>, vector<32x128xf32>
    %4 = arith.truncf %3 : vector<32x128xf32> to vector<32x128xbf16>
    %5 = tpu.iota {dimensions = array<i32: 1>} : vector<64x32xi32>
    %c0_2 = arith.constant 0 : index
    %c0_3 = arith.constant 0 : index
    %6 = vector.load %arg2[%c0_2, %c0_3] : memref<64x1xi32, #tpu.memory_space<vmem>>, vector<64x1xi32>
    %7 = vector.broadcast %6 : vector<64x1xi32> to vector<64x32xi32>
    %8 = arith.cmpi eq, %7, %5 : vector<64x32xi32>
    %cst = arith.constant 1.000000e+00 : f32
    %cst_4 = arith.constant 0.000000e+00 : f32
    %9 = vector.broadcast %cst : f32 to vector<64x32xf32>
    %10 = vector.broadcast %cst_4 : f32 to vector<64x32xf32>
    %11 = arith.select %8, %9, %10 : vector<64x32xi1>, vector<64x32xf32>
    %12 = arith.truncf %11 : vector<64x32xf32> to vector<64x32xbf16>
    %cst_5 = arith.constant dense<0.000000e+00> : vector<64x128xf32>
    %13 = tpu.matmul %12, %4, %cst_5 {dimension_numbers = #tpu.dot_dimension_numbers<[1], [0], [0], [1], [0, 0, 1, 1], [], []>} : vector<64x32xbf16>, vector<32x128xbf16>, vector<64x128xf32> -> vector<64x128xf32>
    %c0_6 = arith.constant 0 : index
    %c0_7 = arith.constant 0 : index
    %c0_8 = arith.constant 0 : index
    %14 = vector.load %arg4[%c0_6, %c0_7, %c0_8] : memref<1x64x128xf32, #tpu.memory_space<vmem>>, vector<1x64x128xf32>
    %15 = vector.shape_cast %14 : vector<1x64x128xf32> to vector<64x128xf32>
    %16 = arith.addf %13, %15 : vector<64x128xf32>
    %cst_9 = arith.constant 0.000000e+00 : f32
    %17 = vector.broadcast %cst_9 : f32 to vector<64x128xf32>
    %18 = arith.maximumf %16, %17 : vector<64x128xf32>
    %19 = tpu.iota {dimensions = array<i32: 0>} : vector<32x64xi32>
    %c0_10 = arith.constant 0 : index
    %c0_11 = arith.constant 0 : index
    %20 = vector.load %arg3[%c0_10, %c0_11] : memref<1x64xi32, #tpu.memory_space<vmem>>, vector<1x64xi32>
    %21 = vector.broadcast %20 : vector<1x64xi32> to vector<32x64xi32>
    %22 = arith.cmpi eq, %21, %19 : vector<32x64xi32>
    %cst_12 = arith.constant 1.000000e+00 : f32
    %cst_13 = arith.constant 0.000000e+00 : f32
    %23 = vector.broadcast %cst_12 : f32 to vector<32x64xf32>
    %24 = vector.broadcast %cst_13 : f32 to vector<32x64xf32>
    %25 = arith.select %22, %23, %24 : vector<32x64xi1>, vector<32x64xf32>
    %26 = arith.truncf %25 : vector<32x64xf32> to vector<32x64xbf16>
    %27 = arith.truncf %18 : vector<64x128xf32> to vector<64x128xbf16>
    %cst_14 = arith.constant dense<0.000000e+00> : vector<32x128xf32>
    %28 = tpu.matmul %26, %27, %cst_14 {dimension_numbers = #tpu.dot_dimension_numbers<[1], [0], [0], [1], [0, 0, 1, 1], [], []>} : vector<32x64xbf16>, vector<64x128xbf16>, vector<32x128xf32> -> vector<32x128xf32>
    %c0_15 = arith.constant 0 : index
    %c0_16 = arith.constant 0 : index
    %c0_17 = arith.constant 0 : index
    %29 = vector.load %arg5[%c0_15, %c0_16, %c0_17] : memref<1x1x128xf32, #tpu.memory_space<vmem>>, vector<1x1x128xf32>
    %30 = vector.shape_cast %29 : vector<1x1x128xf32> to vector<1x128xf32>
    %cst_18 = arith.constant 1.000000e+00 : f32
    %31 = vector.broadcast %cst_18 : f32 to vector<1x128xf32>
    %32 = arith.addf %31, %30 : vector<1x128xf32>
    %33 = vector.broadcast %32 : vector<1x128xf32> to vector<32x128xf32>
    %34 = arith.mulf %33, %3 : vector<32x128xf32>
    %35 = arith.addf %34, %28 : vector<32x128xf32>
    %36 = arith.truncf %35 : vector<32x128xf32> to vector<32x128xbf16>
    %c0_19 = arith.constant 0 : index
    %c0_20 = arith.constant 0 : index
    %c0_21 = arith.constant 0 : index
    %37 = vector.load %arg6[%c0_19, %c0_20, %c0_21] : memref<1x128x128xbf16, #tpu.memory_space<vmem>>, vector<1x128x128xbf16>
    %38 = vector.shape_cast %37 : vector<1x128x128xbf16> to vector<128x128xbf16>
    %cst_22 = arith.constant dense<0.000000e+00> : vector<32x128xf32>
    %39 = tpu.matmul %36, %38, %cst_22 {dimension_numbers = #tpu.dot_dimension_numbers<[1], [0], [0], [1], [0, 0, 1, 1], [], []>} : vector<32x128xbf16>, vector<128x128xbf16>, vector<32x128xf32> -> vector<32x128xf32>
    %c0_23 = arith.constant 0 : index
    %c0_24 = arith.constant 0 : index
    %c0_25 = arith.constant 0 : index
    %40 = vector.load %arg7[%c0_23, %c0_24, %c0_25] : memref<1x1x128xf32, #tpu.memory_space<vmem>>, vector<1x1x128xf32>
    %41 = vector.shape_cast %40 : vector<1x1x128xf32> to vector<1x128xf32>
    %42 = vector.broadcast %41 : vector<1x128xf32> to vector<32x128xf32>
    %43 = arith.addf %39, %42 : vector<32x128xf32>
    %cst_26 = arith.constant 0.000000e+00 : f32
    %44 = vector.broadcast %cst_26 : f32 to vector<32x128xf32>
    %45 = arith.maximumf %43, %44 : vector<32x128xf32>
    %46 = arith.truncf %45 : vector<32x128xf32> to vector<32x128xbf16>
    %c0_27 = arith.constant 0 : index
    %c0_28 = arith.constant 0 : index
    %c0_29 = arith.constant 0 : index
    %47 = vector.load %arg8[%c0_27, %c0_28, %c0_29] : memref<1x128x128xbf16, #tpu.memory_space<vmem>>, vector<1x128x128xbf16>
    %48 = vector.shape_cast %47 : vector<1x128x128xbf16> to vector<128x128xbf16>
    %cst_30 = arith.constant dense<0.000000e+00> : vector<32x128xf32>
    %49 = tpu.matmul %46, %48, %cst_30 {dimension_numbers = #tpu.dot_dimension_numbers<[1], [0], [0], [1], [0, 0, 1, 1], [], []>} : vector<32x128xbf16>, vector<128x128xbf16>, vector<32x128xf32> -> vector<32x128xf32>
    %c0_31 = arith.constant 0 : index
    %c0_32 = arith.constant 0 : index
    %c0_33 = arith.constant 0 : index
    %50 = vector.load %arg9[%c0_31, %c0_32, %c0_33] : memref<1x1x128xf32, #tpu.memory_space<vmem>>, vector<1x1x128xf32>
    %51 = vector.shape_cast %50 : vector<1x1x128xf32> to vector<1x128xf32>
    %52 = vector.broadcast %51 : vector<1x128xf32> to vector<32x128xf32>
    %53 = arith.addf %49, %52 : vector<32x128xf32>
    %c2_i32 = arith.constant 2 : i32
    %54 = arith.cmpi slt, %arg0, %c2_i32 : i32
    %55 = arith.extui %54 : i1 to i32
    %c0_i32_34 = arith.constant 0 : i32
    %56 = arith.cmpi ne, %55, %c0_i32_34 : i32
    scf.if %56 {
      %cst_37 = arith.constant 0.000000e+00 : f32
      %60 = vector.broadcast %cst_37 : f32 to vector<32x128xf32>
      %61 = arith.maximumf %53, %60 : vector<32x128xf32>
      %c0_38 = arith.constant 0 : index
      %c0_39 = arith.constant 0 : index
      %62 = vector.load %arg10[%c0_38, %c0_39] : memref<32x128xf32, #tpu.memory_space<vmem>>, vector<32x128xf32>
      tpu.vector_store %arg10[%c0_38, %c0_39], %61 {strides = array<i32>} : memref<32x128xf32, #tpu.memory_space<vmem>>, vector<32x128xf32>,
    } else {
    }
    %c2_i32_35 = arith.constant 2 : i32
    %57 = arith.cmpi eq, %arg0, %c2_i32_35 : i32
    %58 = arith.extui %57 : i1 to i32
    %c0_i32_36 = arith.constant 0 : i32
    %59 = arith.cmpi ne, %58, %c0_i32_36 : i32
    scf.if %59 {
      %c0_37 = arith.constant 0 : index
      %c0_38 = arith.constant 0 : index
      %60 = vector.load %arg10[%c0_37, %c0_38] : memref<32x128xf32, #tpu.memory_space<vmem>>, vector<32x128xf32>
      tpu.vector_store %arg10[%c0_37, %c0_38], %53 {strides = array<i32>} : memref<32x128xf32, #tpu.memory_space<vmem>>, vector<32x128xf32>,
    } else {
    }
    return
  }
  func.func @transform_0(%arg0: i32) -> (i32, i32) {
    %c0_i32 = arith.constant 0 : i32
    %c0_i32_0 = arith.constant 0 : i32
    %c0_i32_1 = arith.constant 0 : i32
    return %c0_i32, %c0_i32_0 : i32, i32
  }
  func.func @transform_1(%arg0: i32) -> (i32, i32) {
    %c0_i32 = arith.constant 0 : i32
    %c0_i32_0 = arith.constant 0 : i32
    %c0_i32_1 = arith.constant 0 : i32
    return %c0_i32, %c0_i32_0 : i32, i32
  }
  func.func @transform_2(%arg0: i32) -> (i32, i32) {
    %c0_i32 = arith.constant 0 : i32
    %c0_i32_0 = arith.constant 0 : i32
    %c0_i32_1 = arith.constant 0 : i32
    return %c0_i32, %c0_i32_0 : i32, i32
  }
  func.func @transform_3(%arg0: i32) -> (i32, i32, i32) {
    %c0_i32 = arith.constant 0 : i32
    %c0_i32_0 = arith.constant 0 : i32
    %c0_i32_1 = arith.constant 0 : i32
    return %arg0, %c0_i32, %c0_i32_0 : i32, i32, i32
  }
  func.func @transform_4(%arg0: i32) -> (i32, i32, i32) {
    %c0_i32 = arith.constant 0 : i32
    %c0_i32_0 = arith.constant 0 : i32
    %c0_i32_1 = arith.constant 0 : i32
    return %arg0, %c0_i32, %c0_i32_0 : i32, i32, i32
  }
  func.func @transform_5(%arg0: i32) -> (i32, i32, i32) {
    %c0_i32 = arith.constant 0 : i32
    %c0_i32_0 = arith.constant 0 : i32
    %c0_i32_1 = arith.constant 0 : i32
    return %arg0, %c0_i32, %c0_i32_0 : i32, i32, i32
  }
  func.func @transform_6(%arg0: i32) -> (i32, i32, i32) {
    %c0_i32 = arith.constant 0 : i32
    %c0_i32_0 = arith.constant 0 : i32
    %c0_i32_1 = arith.constant 0 : i32
    return %arg0, %c0_i32, %c0_i32_0 : i32, i32, i32
  }
  func.func @transform_7(%arg0: i32) -> (i32, i32, i32) {
    %c0_i32 = arith.constant 0 : i32
    %c0_i32_0 = arith.constant 0 : i32
    %c0_i32_1 = arith.constant 0 : i32
    return %arg0, %c0_i32, %c0_i32_0 : i32, i32, i32
  }
  func.func @transform_8(%arg0: i32) -> (i32, i32, i32) {
    %c0_i32 = arith.constant 0 : i32
    %c0_i32_0 = arith.constant 0 : i32
    %c0_i32_1 = arith.constant 0 : i32
    return %arg0, %c0_i32, %c0_i32_0 : i32, i32, i32
  }
  func.func @transform_9(%arg0: i32) -> (i32, i32) {
    %c0_i32 = arith.constant 0 : i32
    %c0_i32_0 = arith.constant 0 : i32
    %c0_i32_1 = arith.constant 0 : i32
    return %c0_i32, %c0_i32_0 : i32, i32
  }
}

</mosaic_0001>

<llo_original>
// kernel: tpu_custom_call.1
$region0: #{tpu_custom_call.1}
  #allocation0 [shape = 'u32[]', space=smem, size = 0x4, offset = 0x4, fixed_abs, tag = 'smem constant byte address 0x4 - core index']
  #allocation1 [shape = 'u32[144,128]{1,0:T(1,128)}', space=vmem, size = 0x12000, scoped, tag = 'internal scratch']
  %s0 = inlined_call_operand.vmem [shape: f32[32,128], index: 0, kind: input, shape index: {}]
  %s1 = inlined_call_operand.vmem [shape: s32[64,1], index: 1, kind: input, shape index: {}]
  %s2 = inlined_call_operand.vmem [shape: s32[1,64], index: 2, kind: input, shape index: {}]
  %s3 = inlined_call_operand.hbm [shape: f32[3,64,128], index: 3, kind: input, shape index: {}]
  %s4 = inlined_call_operand.vmem [shape: f32[3,1,128], index: 4, kind: input, shape index: {}]
  %s5 = inlined_call_operand.hbm [shape: bf16[3,128,128], index: 5, kind: input, shape index: {}]
  %s6 = inlined_call_operand.vmem [shape: f32[3,1,128], index: 6, kind: input, shape index: {}]
  %s7 = inlined_call_operand.hbm [shape: bf16[3,128,128], index: 7, kind: input, shape index: {}]
  %s8 = inlined_call_operand.vmem [shape: f32[3,1,128], index: 8, kind: input, shape index: {}]
  %s9 = inlined_call_operand.hbm [shape: f32[32,128], index: 9, kind: output, shape index: {}]
  %s10 = sld [smem:[#allocation0]]
  $region93: #{tpu_custom_call.1} parent=0
    _
  %s12 = ssub.s32 1, %s10
  %s13 = scalar_select 0, %s12, %s10
  $region1: #{tpu_custom_call.1} parent=0
    #allocation2 [shape = 'u8[65536]{0}', space=vmem, size = 0x10000, scoped, tag = 'input window, operand 3']
    #allocation3 [shape = 's32[2]{0}', space=sflag, size = 0x8, scoped, tag = 'scoped memory for tpu_custom_call.1']
    #allocation4 [shape = 's32[2]{0}', space=sflag, size = 0x8, scoped, tag = 'scoped memory for tpu_custom_call.1']
    #allocation5 [shape = 'u8[65536]{0}', space=vmem, size = 0x10000, scoped, tag = 'input window, operand 5']
    #allocation6 [shape = 's32[2]{0}', space=sflag, size = 0x8, scoped, tag = 'scoped memory for tpu_custom_call.1']
    #allocation7 [shape = 'u8[65536]{0}', space=vmem, size = 0x10000, scoped, tag = 'input window, operand 7']
    #allocation8 [shape = 'u8[16384]{0}', space=vmem, size = 0x4000, scoped, tag = 'output window, operand 0, single buffered']
    %14 = vsyncpa [#allocation3], 0
    %s15 = scalar_lea.sflag [#allocation3], 1
    %16 = vsyncpa %s15, 0
    %17 = vsyncpa [#allocation6], 0
    %s18 = scalar_lea.sflag [#allocation6], 1
    %19 = vsyncpa %s18, 0
    %20 = vsyncpa [#allocation4], 0
    loop: start=0, step=1, limit=5
    $region2: #{tpu_custom_call.1} parent=1 // loop_pre_header
      _
    $region3: #{tpu_custom_call.1} parent=1 // loop_header
      %s22 = sphi 0, %s26
      %p23 = scmp.ge.s32.totalorder %s22, 5
      %s30 = sphi 0, %s30
      %s32 = sphi 0, %s30
      %s33 = sphi 0, %s32
      %s47 = sphi 0, %s33
      %s51 = sphi 0, %s51
      %s53 = sphi 0, %s51
      %s54 = sphi 0, %s53
      %s68 = sphi 0, %s54
      %s72 = sphi 0, %s72
      %s74 = sphi 0, %s72
      %s75 = sphi 0, %s74
      %s89 = sphi 0, %s75
      %s95 = sphi 0, %s97
      %s98 = sphi 0, %s95
      %s99 = sphi 0, %s98
      %s115 = sphi 0, %s99
      %s121 = sphi 0, %s123
      %s124 = sphi 0, %s121
      %s125 = sphi 0, %s124
      %s141 = sphi 0, %s125
      %s147 = sphi 0, %s149
      %s150 = sphi 0, %s147
      %s151 = sphi 0, %s150
      %s167 = sphi 0, %s151
      %s173 = sphi 0, %s175
      %s176 = sphi 0, %s173
      %s177 = sphi 0, %s176
      %s193 = sphi 0, %s177
      %s199 = sphi 0, %s201
      %s202 = sphi 0, %s199
      %s203 = sphi 0, %s202
      %s219 = sphi 0, %s203
      %s225 = sphi 0, %s227
      %s228 = sphi 0, %s225
      %s229 = sphi 0, %s228
      %s245 = sphi 0, %s229
      %s249 = sphi 0, %s249
      %s251 = sphi 0, %s249
      %s252 = sphi 0, %s251
      %s266 = sphi 0, %s252
    $region4: #{tpu_custom_call.1} parent=1 // loop_header_branch
      %25 = sbr.rel (%p23) target = $region8
    $region5: #{tpu_custom_call.1} parent=1 // loop_body
      %s27 = ssub.s32 %s22, 1
      %s28 = ssub.s32 %s22, 2
      %s29 = sadd.s32 %s22, 1
      %s31 = sadd.s32 %s30, 1
      %p34 = scmp.eq.s32.totalorder %s22, 2
      %p35 = scmp.ne.s32.totalorder %s30, %s32
      %p36 = scmp.eq.s32.totalorder %s22, 0
      %p37 = por %p35, %p36
      %p38 = scmp.ne.s32.totalorder %s30, %s32
      %p39 = scmp.eq.s32.totalorder %s27, 2
      %p40 = por %p38, %p39
      %p41 = scmp.ne.s32.totalorder %s32, %s33
      %p42 = scmp.eq.s32.totalorder %s27, 0
      %p43 = por %p41, %p42
      %p44 = scmp.ne.s32.totalorder %s32, %s33
      %p45 = scmp.eq.s32.totalorder %s28, 2
      %p46 = por %p44, %p45
      %p48 = scmp.ne.s32.totalorder %s33, %s47
      %p49 = scmp.eq.s32.totalorder %s28, 0
      %p50 = por %p48, %p49
      %s52 = sadd.s32 %s51, 1
      %p55 = scmp.eq.s32.totalorder %s22, 2
      %p56 = scmp.ne.s32.totalorder %s51, %s53
      %p57 = scmp.eq.s32.totalorder %s22, 0
      %p58 = por %p56, %p57
      %p59 = scmp.ne.s32.totalorder %s51, %s53
      %p60 = scmp.eq.s32.totalorder %s27, 2
      %p61 = por %p59, %p60
      %p62 = scmp.ne.s32.totalorder %s53, %s54
      %p63 = scmp.eq.s32.totalorder %s27, 0
      %p64 = por %p62, %p63
      %p65 = scmp.ne.s32.totalorder %s53, %s54
      %p66 = scmp.eq.s32.totalorder %s28, 2
      %p67 = por %p65, %p66
      %p69 = scmp.ne.s32.totalorder %s54, %s68
      %p70 = scmp.eq.s32.totalorder %s28, 0
      %p71 = por %p69, %p70
      %s73 = sadd.s32 %s72, 1
      %p76 = scmp.eq.s32.totalorder %s22, 2
      %p77 = scmp.ne.s32.totalorder %s72, %s74
      %p78 = scmp.eq.s32.totalorder %s22, 0
      %p79 = por %p77, %p78
      %p80 = scmp.ne.s32.totalorder %s72, %s74
      %p81 = scmp.eq.s32.totalorder %s27, 2
      %p82 = por %p80, %p81
      %p83 = scmp.ne.s32.totalorder %s74, %s75
      %p84 = scmp.eq.s32.totalorder %s27, 0
      %p85 = por %p83, %p84
      %p86 = scmp.ne.s32.totalorder %s74, %s75
      %p87 = scmp.eq.s32.totalorder %s28, 2
      %p88 = por %p86, %p87
      %p90 = scmp.ne.s32.totalorder %s75, %s89
      %p91 = scmp.eq.s32.totalorder %s28, 0
      %p92 = por %p90, %p91
      %s93 = ssub.s32 %s22, %s29
      %p94 = scmp.eq.s32.totalorder %s93, 0
      %s96 = sadd.s32 %s95, 1
      %s97 = scalar_select %p94, %s95, %s96
      %p100 = pneg %p94
      %p101 = scmp.eq.s32.totalorder %s22, 2
      %p102 = por %p100, %p101
      %p103 = scmp.ne.s32.totalorder %s95, %s98
      %p104 = scmp.eq.s32.totalorder %s22, 0
      %p105 = por %p103, %p104
      %p106 = scmp.ne.s32.totalorder %s95, %s98
      %p107 = scmp.eq.s32.totalorder %s27, 2
      %p108 = por %p106, %p107
      %p109 = scmp.ne.s32.totalorder %s98, %s99
      %p110 = scmp.eq.s32.totalorder %s27, 0
      %p111 = por %p109, %p110
      %p112 = scmp.ne.s32.totalorder %s98, %s99
      %p113 = scmp.eq.s32.totalorder %s28, 2
      %p114 = por %p112, %p113
      %p116 = scmp.ne.s32.totalorder %s99, %s115
      %p117 = scmp.eq.s32.totalorder %s28, 0
      %p118 = por %p116, %p117
      %s119 = ssub.s32 %s22, %s29
      %p120 = scmp.eq.s32.totalorder %s119, 0
      %s122 = sadd.s32 %s121, 1
      %s123 = scalar_select %p120, %s121, %s122
      %p126 = pneg %p120
      %p127 = scmp.eq.s32.totalorder %s22, 2
      %p128 = por %p126, %p127
      %p129 = scmp.ne.s32.totalorder %s121, %s124
      %p130 = scmp.eq.s32.totalorder %s22, 0
      %p131 = por %p129, %p130
      %p132 = scmp.ne.s32.totalorder %s121, %s124
      %p133 = scmp.eq.s32.totalorder %s27, 2
      %p134 = por %p132, %p133
      %p135 = scmp.ne.s32.totalorder %s124, %s125
      %p136 = scmp.eq.s32.totalorder %s27, 0
      %p137 = por %p135, %p136
      %p138 = scmp.ne.s32.totalorder %s124, %s125
      %p139 = scmp.eq.s32.totalorder %s28, 2
      %p140 = por %p138, %p139
      %p142 = scmp.ne.s32.totalorder %s125, %s141
      %p143 = scmp.eq.s32.totalorder %s28, 0
      %p144 = por %p142, %p143
      %s145 = ssub.s32 %s22, %s29
      %p146 = scmp.eq.s32.totalorder %s145, 0
      %s148 = sadd.s32 %s147, 1
      %s149 = scalar_select %p146, %s147, %s148
      %p152 = pneg %p146
      %p153 = scmp.eq.s32.totalorder %s22, 2
      %p154 = por %p152, %p153
      %p155 = scmp.ne.s32.totalorder %s147, %s150
      %p156 = scmp.eq.s32.totalorder %s22, 0
      %p157 = por %p155, %p156
      %p158 = scmp.ne.s32.totalorder %s147, %s150
      %p159 = scmp.eq.s32.totalorder %s27, 2
      %p160 = por %p158, %p159
      %p161 = scmp.ne.s32.totalorder %s150, %s151
      %p162 = scmp.eq.s32.totalorder %s27, 0
      %p163 = por %p161, %p162
      %p164 = scmp.ne.s32.totalorder %s150, %s151
      %p165 = scmp.eq.s32.totalorder %s28, 2
      %p166 = por %p164, %p165
      %p168 = scmp.ne.s32.totalorder %s151, %s167
      %p169 = scmp.eq.s32.totalorder %s28, 0
      %p170 = por %p168, %p169
      %s171 = ssub.s32 %s22, %s29
      %p172 = scmp.eq.s32.totalorder %s171, 0
      %s174 = sadd.s32 %s173, 1
      %s175 = scalar_select %p172, %s173, %s174
      %p178 = pneg %p172
      %p179 = scmp.eq.s32.totalorder %s22, 2
      %p180 = por %p178, %p179
      %p181 = scmp.ne.s32.totalorder %s173, %s176
      %p182 = scmp.eq.s32.totalorder %s22, 0
      %p183 = por %p181, %p182
      %p184 = scmp.ne.s32.totalorder %s173, %s176
      %p185 = scmp.eq.s32.totalorder %s27, 2
      %p186 = por %p184, %p185
      %p187 = scmp.ne.s32.totalorder %s176, %s177
      %p188 = scmp.eq.s32.totalorder %s27, 0
      %p189 = por %p187, %p188
      %p190 = scmp.ne.s32.totalorder %s176, %s177
      %p191 = scmp.eq.s32.totalorder %s28, 2
      %p192 = por %p190, %p191
      %p194 = scmp.ne.s32.totalorder %s177, %s193
      %p195 = scmp.eq.s32.totalorder %s28, 0
      %p196 = por %p194, %p195
      %s197 = ssub.s32 %s22, %s29
      %p198 = scmp.eq.s32.totalorder %s197, 0
      %s200 = sadd.s32 %s199, 1
      %s201 = scalar_select %p198, %s199, %s200
      %p204 = pneg %p198
      %p205 = scmp.eq.s32.totalorder %s22, 2
      %p206 = por %p204, %p205
      %p207 = scmp.ne.s32.totalorder %s199, %s202
      %p208 = scmp.eq.s32.totalorder %s22, 0
      %p209 = por %p207, %p208
      %p210 = scmp.ne.s32.totalorder %s199, %s202
      %p211 = scmp.eq.s32.totalorder %s27, 2
      %p212 = por %p210, %p211
      %p213 = scmp.ne.s32.totalorder %s202, %s203
      %p214 = scmp.eq.s32.totalorder %s27, 0
      %p215 = por %p213, %p214
      %p216 = scmp.ne.s32.totalorder %s202, %s203
      %p217 = scmp.eq.s32.totalorder %s28, 2
      %p218 = por %p216, %p217
      %p220 = scmp.ne.s32.totalorder %s203, %s219
      %p221 = scmp.eq.s32.totalorder %s28, 0
      %p222 = por %p220, %p221
      %s223 = ssub.s32 %s22, %s29
      %p224 = scmp.eq.s32.totalorder %s223, 0
      %s226 = sadd.s32 %s225, 1
      %s227 = scalar_select %p224, %s225, %s226
      %p230 = pneg %p224
      %p231 = scmp.eq.s32.totalorder %s22, 2
      %p232 = por %p230, %p231
      %p233 = scmp.ne.s32.totalorder %s225, %s228
      %p234 = scmp.eq.s32.totalorder %s22, 0
      %p235 = por %p233, %p234
      %p236 = scmp.ne.s32.totalorder %s225, %s228
      %p237 = scmp.eq.s32.totalorder %s27, 2
      %p238 = por %p236, %p237
      %p239 = scmp.ne.s32.totalorder %s228, %s229
      %p240 = scmp.eq.s32.totalorder %s27, 0
      %p241 = por %p239, %p240
      %p242 = scmp.ne.s32.totalorder %s228, %s229
      %p243 = scmp.eq.s32.totalorder %s28, 2
      %p244 = por %p242, %p243
      %p246 = scmp.ne.s32.totalorder %s229, %s245
      %p247 = scmp.eq.s32.totalorder %s28, 0
      %p248 = por %p246, %p247
      %s250 = sadd.s32 %s249, 1
      %p253 = scmp.eq.s32.totalorder %s22, 2
      %p254 = scmp.ne.s32.totalorder %s249, %s251
      %p255 = scmp.eq.s32.totalorder %s22, 0
      %p256 = por %p254, %p255
      %p257 = scmp.ne.s32.totalorder %s249, %s251
      %p258 = scmp.eq.s32.totalorder %s27, 2
      %p259 = por %p257, %p258
      %p260 = scmp.ne.s32.totalorder %s251, %s252
      %p261 = scmp.eq.s32.totalorder %s27, 0
      %p262 = por %p260, %p261
      %p263 = scmp.ne.s32.totalorder %s251, %s252
      %p264 = scmp.eq.s32.totalorder %s28, 2
      %p265 = por %p263, %p264
      %p267 = scmp.ne.s32.totalorder %s252, %s266
      %p268 = scmp.eq.s32.totalorder %s28, 0
      %p269 = por %p267, %p268
      %p270 = scmp.le.s32.totalorder 1, %s22
      %p271 = scmp.lt.s32.totalorder %s22, 4
      %p272 = pnand %p270, %p271
      %p273 = pneg %p272
      // Predicated region
      $region9: #{tpu_custom_call.1} parent=5 // pred_check
        _
      $region10: #{tpu_custom_call.1} parent=5 // pred_check_branch
        %275 = sbr.rel (%p272) target = $region12
      $region11: #{tpu_custom_call.1} parent=5 // pred_region
        %s276 = ssub.s32 %s22, 1
        // Predicated region
        $region13: #{tpu_custom_call.1} parent=11 // pred_check
          %p277 = pneg %p43
        $region14: #{tpu_custom_call.1} parent=11 // pred_check_branch
          %279 = sbr.rel (%p277) target = $region16
        $region15: #{tpu_custom_call.1} parent=11 // pred_region
          _
        $region16: #{tpu_custom_call.1} parent=11 // pred_fallthru
          _
        // Predicated region
        $region17: #{tpu_custom_call.1} parent=11 // pred_check
          %p280 = pneg %p64
        $region18: #{tpu_custom_call.1} parent=11 // pred_check_branch
          %282 = sbr.rel (%p280) target = $region20
        $region19: #{tpu_custom_call.1} parent=11 // pred_region
          _
        $region20: #{tpu_custom_call.1} parent=11 // pred_fallthru
          _
        // Predicated region
        $region21: #{tpu_custom_call.1} parent=11 // pred_check
          %p283 = pneg %p85
        $region22: #{tpu_custom_call.1} parent=11 // pred_check_branch
          %285 = sbr.rel (%p283) target = $region24
        $region23: #{tpu_custom_call.1} parent=11 // pred_region
          _
        $region24: #{tpu_custom_call.1} parent=11 // pred_fallthru
          _
      $region12: #{tpu_custom_call.1} parent=5 // pred_fallthru
        _
      %p286 = scmp.lt.s32.totalorder %s22, 3
      // Predicated region
      $region25: #{tpu_custom_call.1} parent=5 // pred_check
        %p287 = pneg %p286
      $region26: #{tpu_custom_call.1} parent=5 // pred_check_branch
        %289 = sbr.rel (%p287) target = $region28
      $region27: #{tpu_custom_call.1} parent=5 // pred_region
        // Predicated region
        $region29: #{tpu_custom_call.1} parent=27 // pred_check
          %p290 = pneg %p105
        $region30: #{tpu_custom_call.1} parent=27 // pred_check_branch
          %292 = sbr.rel (%p290) target = $region32
        $region31: #{tpu_custom_call.1} parent=27 // pred_region
          %s293 = sand.u32 %s95, 1
          %s294 = scalar_lea.sflag [#allocation3], %s293
          %s295 = sand.u32 %s95, 1
          %s296 = smul.addr %s295, 64
          %s297 = scalar_lea.vmem [#allocation2], %s296
          %s299 = ssub.s32 1024, 1024
          %300 = vsyncadd %s294, %s299
          %s301 = smul.addr %s22, 8
          %s302 = smul.addr %s301, 128
          %s303 = scalar_lea.hbm %s3, %s302
          %s304 = sshll.u32 %s297, 4
          %s305 = int_to_ptr.vmem [resolvable:$true] %s304
          %310 = dma.hbm_to_vmem [thread:$0]  %s303, 1024, %s305, %s294, 128, 128, 8
        $region32: #{tpu_custom_call.1} parent=27 // pred_fallthru
          _
        // Predicated region
        $region33: #{tpu_custom_call.1} parent=27 // pred_check
          %p311 = pneg %p131
        $region34: #{tpu_custom_call.1} parent=27 // pred_check_branch
          %313 = sbr.rel (%p311) target = $region36
        $region35: #{tpu_custom_call.1} parent=27 // pred_region
          %p314 = scmp.lt.s32.totalorder %s22, 2
          %s315 = scalar_select %p314, %s22, 2
          %s316 = scalar_lea.vmem %s4, %s315
        $region36: #{tpu_custom_call.1} parent=27 // pred_fallthru
          _
        // Predicated region
        $region37: #{tpu_custom_call.1} parent=27 // pred_check
          %p317 = pneg %p157
        $region38: #{tpu_custom_call.1} parent=27 // pred_check_branch
          %319 = sbr.rel (%p317) target = $region40
        $region39: #{tpu_custom_call.1} parent=27 // pred_region
          %s320 = sand.u32 %s22, 1
          %s321 = scalar_lea.sflag [#allocation6], %s320
          %s322 = sand.u32 %s147, 1
          %s323 = smul.addr %s322, 64
          %s324 = scalar_lea.vmem [#allocation5], %s323
          %s326 = ssub.s32 1024, 1024
          %327 = vsyncadd %s321, %s326
          %s328 = smul.addr %s22, 16
          %s329 = smul.addr %s328, 64
          %s330 = scalar_lea.hbm %s5, %s329
          %s331 = sshll.u32 %s324, 4
          %s332 = int_to_ptr.vmem [resolvable:$true] %s331
          %337 = dma.hbm_to_vmem [thread:$0]  %s330, 1024, %s332, %s321, 64, 64, 4
        $region40: #{tpu_custom_call.1} parent=27 // pred_fallthru
          _
        // Predicated region
        $region41: #{tpu_custom_call.1} parent=27 // pred_check
          %p338 = pneg %p183
        $region42: #{tpu_custom_call.1} parent=27 // pred_check_branch
          %340 = sbr.rel (%p338) target = $region44
        $region43: #{tpu_custom_call.1} parent=27 // pred_region
          %p341 = scmp.lt.s32.totalorder %s22, 2
          %s342 = scalar_select %p341, %s22, 2
          %s343 = scalar_lea.vmem %s6, %s342
        $region44: #{tpu_custom_call.1} parent=27 // pred_fallthru
          _
        // Predicated region
        $region45: #{tpu_custom_call.1} parent=27 // pred_check
          %p344 = pneg %p209
        $region46: #{tpu_custom_call.1} parent=27 // pred_check_branch
          %346 = sbr.rel (%p344) target = $region48
        $region47: #{tpu_custom_call.1} parent=27 // pred_region
          %s347 = sand.u32 %s22, 1
          %s348 = scalar_lea.sflag [#allocation6], %s347
          %s349 = sand.u32 %s199, 1
          %s350 = smul.addr %s349, 64
          %s351 = scalar_lea.vmem [#allocation7], %s350
          %s353 = ssub.s32 1024, 1024
          %354 = vsyncadd %s348, %s353
          %s355 = smul.addr %s22, 16
          %s356 = smul.addr %s355, 64
          %s357 = scalar_lea.hbm %s7, %s356
          %s358 = sshll.u32 %s351, 4
          %s359 = int_to_ptr.vmem [resolvable:$true] %s358
          %364 = dma.hbm_to_vmem [thread:$0]  %s357, 1024, %s359, %s348, 64, 64, 4
        $region48: #{tpu_custom_call.1} parent=27 // pred_fallthru
          _
        // Predicated region
        $region49: #{tpu_custom_call.1} parent=27 // pred_check
          %p365 = pneg %p235
        $region50: #{tpu_custom_call.1} parent=27 // pred_check_branch
          %367 = sbr.rel (%p365) target = $region52
        $region51: #{tpu_custom_call.1} parent=27 // pred_region
          %p368 = scmp.lt.s32.totalorder %s22, 2
          %s369 = scalar_select %p368, %s22, 2
          %s370 = scalar_lea.vmem %s8, %s369
        $region52: #{tpu_custom_call.1} parent=27 // pred_fallthru
          _
      $region28: #{tpu_custom_call.1} parent=5 // pred_fallthru
        _
      %p371 = scmp.le.s32.totalorder 1, %s22
      %p372 = scmp.lt.s32.totalorder %s22, 4
      %p373 = pnand %p371, %p372
      %p374 = pneg %p373
      // Predicated region
      $region53: #{tpu_custom_call.1} parent=5 // pred_check
        _
      $region54: #{tpu_custom_call.1} parent=5 // pred_check_branch
        %376 = sbr.rel (%p373) target = $region56
      $region55: #{tpu_custom_call.1} parent=5 // pred_region
        %s377 = ssub.s32 %s22, 1
        %s378 = sand.u32 %s98, 1
        %s379 = scalar_lea.sflag [#allocation3], %s378
        %s380 = sand.u32 %s98, 1
        %s381 = smul.addr %s380, 64
        %s382 = scalar_lea.vmem [#allocation2], %s381
        // Predicated region
        $region57: #{tpu_custom_call.1} parent=55 // pred_check
          %p383 = pneg %p111
        $region58: #{tpu_custom_call.1} parent=55 // pred_check_branch
          %385 = sbr.rel (%p383) target = $region60
        $region59: #{tpu_custom_call.1} parent=55 // pred_region
          %386 = dma.done %s379, 1024
        $region60: #{tpu_custom_call.1} parent=55 // pred_fallthru
          _
        %s387 = sand.u32 %s27, 1
        %s388 = scalar_lea.sflag [#allocation6], %s387
        %s389 = sand.u32 %s150, 1
        %s390 = smul.addr %s389, 64
        %s391 = scalar_lea.vmem [#allocation5], %s390
        // Predicated region
        $region61: #{tpu_custom_call.1} parent=55 // pred_check
          %p392 = pneg %p163
        $region62: #{tpu_custom_call.1} parent=55 // pred_check_branch
          %394 = sbr.rel (%p392) target = $region64
        $region63: #{tpu_custom_call.1} parent=55 // pred_region
          %395 = dma.done %s388, 1024
        $region64: #{tpu_custom_call.1} parent=55 // pred_fallthru
          _
        %s396 = sand.u32 %s27, 1
        %s397 = scalar_lea.sflag [#allocation6], %s396
        %s398 = sand.u32 %s202, 1
        %s399 = smul.addr %s398, 64
        %s400 = scalar_lea.vmem [#allocation7], %s399
        // Predicated region
        $region65: #{tpu_custom_call.1} parent=55 // pred_check
          %p401 = pneg %p215
        $region66: #{tpu_custom_call.1} parent=55 // pred_check_branch
          %403 = sbr.rel (%p401) target = $region68
        $region67: #{tpu_custom_call.1} parent=55 // pred_region
          %404 = dma.done %s397, 1024
        $region68: #{tpu_custom_call.1} parent=55 // pred_fallthru
          _
        %p405 = pneg %p43
        %p406 = pneg %p40
        %p407 = pneg %p64
        %p408 = pneg %p61
        %p409 = pneg %p85
        %p410 = pneg %p82
        %s411 = sand.u32 %s98, 1
        %s412 = scalar_lea.sflag [#allocation3], %s411
        %s413 = sand.u32 %s98, 1
        %s414 = smul.addr %s413, 64
        %s415 = scalar_lea.vmem [#allocation2], %s414
        %p416 = pneg %p111
        %p417 = pneg %p108
        %p418 = scmp.lt.s32.totalorder %s27, 2
        %s419 = scalar_select %p418, %s27, 2
        %s420 = scalar_lea.vmem %s4, %s419
        %p421 = pneg %p137
        %p422 = pneg %p134
        %s423 = sand.u32 %s27, 1
        %s424 = scalar_lea.sflag [#allocation6], %s423
        %s425 = sand.u32 %s150, 1
        %s426 = smul.addr %s425, 64
        %s427 = scalar_lea.vmem [#allocation5], %s426
        %p428 = pneg %p163
        %p429 = pneg %p160
        %p430 = scmp.lt.s32.totalorder %s27, 2
        %s431 = scalar_select %p430, %s27, 2
        %s432 = scalar_lea.vmem %s6, %s431
        %p433 = pneg %p189
        %p434 = pneg %p186
        %s435 = sand.u32 %s27, 1
        %s436 = scalar_lea.sflag [#allocation6], %s435
        %s437 = sand.u32 %s202, 1
        %s438 = smul.addr %s437, 64
        %s439 = scalar_lea.vmem [#allocation7], %s438
        %p440 = pneg %p215
        %p441 = pneg %p212
        %p442 = scmp.lt.s32.totalorder %s27, 2
        %s443 = scalar_select %p442, %s27, 2
        %s444 = scalar_lea.vmem %s8, %s443
        %p445 = pneg %p241
        %p446 = pneg %p238
        %p447 = pneg %p262
        %p448 = pneg %p259
        %p449 = scmp.lt.s32.totalorder %s27, 2
        %s450 = scalar_select %p449, %s27, 2
        %s451 = scalar_lea.vmem %s4, %s450
        %p452 = scmp.lt.s32.totalorder %s27, 2
        %s453 = scalar_select %p452, %s27, 2
        %s454 = scalar_lea.vmem %s6, %s453
        %p455 = scmp.lt.s32.totalorder %s27, 2
        %s456 = scalar_select %p455, %s27, 2
        %s457 = scalar_lea.vmem %s8, %s456
        %p459 = scmp.eq.s32.totalorder %s27, 0
        // Predicated region
        $region69: #{tpu_custom_call.1} parent=55 // pred_check
          %p460 = pneg %p459
        $region70: #{tpu_custom_call.1} parent=55 // pred_check_branch
          %462 = sbr.rel (%p460) target = $region72
        $region71: #{tpu_custom_call.1} parent=55 // pred_region
          %v463 = vld [vmem:[%s0] sm:$0xff]
          %v464 = vld [vmem:[%s0 + $0x8] sm:$0xff]
          %v465 = vld [vmem:[%s0 + $0x10] sm:$0xff]
          %v466 = vld [vmem:[%s0 + $0x18] sm:$0xff]
          %467 = vst [vmem:[#allocation8] sm:$0xff] %v463
          %468 = vst [vmem:[#allocation8 + $0x8] sm:$0xff] %v464
          %469 = vst [vmem:[#allocation8 + $0x10] sm:$0xff] %v465
          %470 = vst [vmem:[#allocation8 + $0x18] sm:$0xff] %v466
        $region72: #{tpu_custom_call.1} parent=55 // pred_fallthru
          _
        %v471 = vld [vmem:[#allocation8] sm:$0xff]
        %v472 = vld [vmem:[#allocation8 + $0x8] sm:$0xff]
        %v473 = vld [vmem:[#allocation8 + $0x10] sm:$0xff]
        %v474 = vld [vmem:[#allocation8 + $0x18] sm:$0xff]
        %v475 = vpack.c.bf16 %v472, %v471
        %v476 = vpack.c.bf16 %v474, %v473
        %v477 = vlaneseq
        %v478 = vand.u32 %v477, 127
        %v479 = vld [vmem:[%s1] sm:$0xff]
        %v480 = vld [vmem:[%s1 + $0x8] sm:$0xff]
        %v481 = vld [vmem:[%s1 + $0x10] sm:$0xff]
        %v482 = vld [vmem:[%s1 + $0x18] sm:$0xff]
        %v483 = vld [vmem:[%s1 + $0x20] sm:$0xff]
        %v484 = vld [vmem:[%s1 + $0x28] sm:$0xff]
        %v485 = vld [vmem:[%s1 + $0x30] sm:$0xff]
        %v486 = vld [vmem:[%s1 + $0x38] sm:$0xff]
        %487 = vset.pattern.permute.xlu0 0
        %488 = vperm.xlu0 %487, %v479
        %v489 = vpop.permute.xlu0 %488
        %490 = vset.pattern.permute.xlu0 0
        %491 = vperm.xlu0 %490, %v480
        %v492 = vpop.permute.xlu0 %491
        %493 = vset.pattern.permute.xlu0 0
        %494 = vperm.xlu0 %493, %v481
        %v495 = vpop.permute.xlu0 %494
        %496 = vset.pattern.permute.xlu0 0
        %497 = vperm.xlu0 %496, %v482
        %v498 = vpop.permute.xlu0 %497
        %499 = vset.pattern.permute.xlu0 0
        %500 = vperm.xlu0 %499, %v483
        %v501 = vpop.permute.xlu0 %500
        %502 = vset.pattern.permute.xlu0 0
        %503 = vperm.xlu0 %502, %v484
        %v504 = vpop.permute.xlu0 %503
        %505 = vset.pattern.permute.xlu0 0
        %506 = vperm.xlu0 %505, %v485
        %v507 = vpop.permute.xlu0 %506
        %508 = vset.pattern.permute.xlu0 0
        %509 = vperm.xlu0 %508, %v486
        %v510 = vpop.permute.xlu0 %509
        %vm511 = vcmp.eq.s32.totalorder %v489, %v478
        %vm512 = vcmp.eq.s32.totalorder %v492, %v478
        %vm513 = vcmp.eq.s32.totalorder %v495, %v478
        %vm514 = vcmp.eq.s32.totalorder %v498, %v478
        %vm515 = vcmp.eq.s32.totalorder %v501, %v478
        %vm516 = vcmp.eq.s32.totalorder %v504, %v478
        %vm517 = vcmp.eq.s32.totalorder %v507, %v478
        %vm518 = vcmp.eq.s32.totalorder %v510, %v478
        %v519 = vsel %vm511, 1.0, 0.0
        %v520 = vsel %vm512, 1.0, 0.0
        %v521 = vsel %vm513, 1.0, 0.0
        %v522 = vsel %vm514, 1.0, 0.0
        %v523 = vsel %vm515, 1.0, 0.0
        %v524 = vsel %vm516, 1.0, 0.0
        %v525 = vsel %vm517, 1.0, 0.0
        %v526 = vsel %vm518, 1.0, 0.0
        %v527 = vpack.c.bf16 %v520, %v519
        %v528 = vpack.c.bf16 %v522, %v521
        %v529 = vpack.c.bf16 %v524, %v523
        %v530 = vpack.c.bf16 %v526, %v525
        %v531 = vld [vmem:[%s382] sm:$0xff]
        %v532 = vld [vmem:[%s382 + $0x8] sm:$0xff]
        %v533 = vld [vmem:[%s382 + $0x10] sm:$0xff]
        %v534 = vld [vmem:[%s382 + $0x18] sm:$0xff]
        %v535 = vld [vmem:[%s382 + $0x20] sm:$0xff]
        %v536 = vld [vmem:[%s382 + $0x28] sm:$0xff]
        %v537 = vld [vmem:[%s382 + $0x30] sm:$0xff]
        %v538 = vld [vmem:[%s382 + $0x38] sm:$0xff]
        %vm539 = vcmask 261120
        %v541 = vsel %vm539, %v527, 0
        %v544 = vsel %vm539, %v528, 0
        %v547 = vsel %vm539, %v529, 0
        %v550 = vsel %vm539, %v530, 0
        %552 = vmatprep.subr.bf16.mxu0 0
        %553 = vmatpush1.bf16.msra.mxu0 0
        %554 = vmatprep.subr.bf16.mxu0 0
        %555 = vmatpush1.bf16.msra.mxu0 0
        %556 = vmatprep.subr.bf16.mxu0 0
        %557 = vmatpush1.bf16.msra.mxu0 0
        %558 = vmatprep.subr.bf16.mxu0 0
        %559 = vmatpush1.bf16.msra.mxu0 0
        %560 = vmatprep.subr.bf16.mxu0 0
        %561 = vmatpush1.bf16.msra.mxu0 0
        %562 = vmatprep.subr.bf16.mxu0 0
        %563 = vmatpush1.bf16.msra.mxu0 0
        %564 = vmatprep.subr.bf16.mxu0 0
        %565 = vmatpush1.bf16.msra.mxu0 %v476
        %566 = vmatprep.subr.bf16.mxu0 0
        %567 = vmatpush1.bf16.msra.mxu0 %v475
        %568 = vmatprep.subr.bf16.mxu0 0
        %569 = vmatpush2.bf16.msra.mxu0 0
        %570 = vmatprep.subr.bf16.mxu0 0
        %571 = vmatpush2.bf16.msra.mxu0 0
        %572 = vmatprep.subr.bf16.mxu0 0
        %573 = vmatpush2.bf16.msra.mxu0 0
        %574 = vmatprep.subr.bf16.mxu0 0
        %575 = vmatpush2.bf16.msra.mxu0 0
        %576 = vmatprep.subr.bf16.mxu0 0
        %577 = vmatpush2.bf16.msra.mxu0 0
        %578 = vmatprep.subr.bf16.mxu0 0
        %579 = vmatpush2.bf16.msra.mxu0 0
        %580 = vmatprep.subr.bf16.mxu0 0
        %581 = vmatpush2.bf16.msra.mxu0 0
        %582 = vmatprep.subr.bf16.mxu0 0
        %583 = vmatpush2.bf16.msra.mxu0 0
        %584 = vmatprep.mubr.bf16.mxu0 0
        %585 = vmatmul.mubr.bf16.gmra.mxu0 %v541
        %v586 = vpop.f32.mrf.mxu0
        %v587 = vadd.f32 %v531, %v586
        %v588 = vpop.f32.mrf.mxu0
        %v589 = vpop.f32.mrf.mxu0
        %v590 = vadd.f32 %v532, %v589
        %v591 = vpop.f32.mrf.mxu0
        %592 = vmatprep.mubr.bf16.mxu0 0
        %593 = vmatmul.mubr.bf16.gmra.mxu0 %v544
        %v594 = vpop.f32.mrf.mxu0
        %v595 = vadd.f32 %v533, %v594
        %v596 = vpop.f32.mrf.mxu0
        %v597 = vpop.f32.mrf.mxu0
        %v598 = vadd.f32 %v534, %v597
        %v599 = vpop.f32.mrf.mxu0
        %600 = vmatprep.mubr.bf16.mxu0 0
        %601 = vmatmul.mubr.bf16.gmra.mxu0 %v547
        %v602 = vpop.f32.mrf.mxu0
        %v603 = vadd.f32 %v535, %v602
        %v604 = vpop.f32.mrf.mxu0
        %v605 = vpop.f32.mrf.mxu0
        %v606 = vadd.f32 %v536, %v605
        %v607 = vpop.f32.mrf.mxu0
        %608 = vmatprep.mubr.bf16.mxu0 0
        %609 = vmatmul.mubr.bf16.gmra.mxu0 %v550
        %v610 = vpop.f32.mrf.mxu0
        %v611 = vadd.f32 %v537, %v610
        %v612 = vpop.f32.mrf.mxu0
        %v613 = vpop.f32.mrf.mxu0
        %v614 = vadd.f32 %v538, %v613
        %v615 = vpop.f32.mrf.mxu0
        %616 = vdwg.mxu0
        %v617 = vmax.f32 %v587, 0.0
        %v618 = vmax.f32 %v590, 0.0
        %v619 = vmax.f32 %v595, 0.0
        %v620 = vmax.f32 %v598, 0.0
        %v621 = vmax.f32 %v603, 0.0
        %v622 = vmax.f32 %v606, 0.0
        %v623 = vmax.f32 %v611, 0.0
        %v624 = vmax.f32 %v614, 0.0
        %v625 = vlaneseq
        %v626 = vshrl.u32 %v625, 7
        %v627 = vadd.s32 %v626, 8
        %v628 = vadd.s32 %v626, 16
        %v629 = vadd.s32 %v626, 24
        %v630 = vld [vmem:[%s2] sm:$0x1]
        %v631 = vlaneseq
        %v632 = vshrl.u32 %v631, 7
        %v633 = vsub.s32 0, %v632
        %v634 = vrot.slane %v630, %v633
        %vm635 = vcmp.eq.s32.totalorder %v634, %v626
        %vm636 = vcmp.eq.s32.totalorder %v634, %v627
        %vm637 = vcmp.eq.s32.totalorder %v634, %v628
        %vm638 = vcmp.eq.s32.totalorder %v634, %v629
        %v639 = vsel %vm635, 1.0, 0.0
        %v640 = vsel %vm636, 1.0, 0.0
        %v641 = vsel %vm637, 1.0, 0.0
        %v642 = vsel %vm638, 1.0, 0.0
        %v643 = vpack.c.bf16 %v640, %v639
        %v644 = vpack.c.bf16 %v642, %v641
        %v645 = vpack.c.bf16 %v618, %v617
        %v646 = vpack.c.bf16 %v620, %v619
        %v647 = vpack.c.bf16 %v622, %v621
        %v648 = vpack.c.bf16 %v624, %v623
        %vm649 = vcmask 523264
        %v651 = vsel %vm649, %v643, 0
        %v654 = vsel %vm649, %v644, 0
        %656 = vmatprep.subr.bf16.mxu0 0
        %657 = vmatpush1.bf16.msra.mxu0 0
        %658 = vmatprep.subr.bf16.mxu0 0
        %659 = vmatpush1.bf16.msra.mxu0 0
        %660 = vmatprep.subr.bf16.mxu0 0
        %661 = vmatpush1.bf16.msra.mxu0 0
        %662 = vmatprep.subr.bf16.mxu0 0
        %663 = vmatpush1.bf16.msra.mxu0 0
        %664 = vmatprep.subr.bf16.mxu0 0
        %665 = vmatpush1.bf16.msra.mxu0 %v648
        %666 = vmatprep.subr.bf16.mxu0 0
        %667 = vmatpush1.bf16.msra.mxu0 %v647
        %668 = vmatprep.subr.bf16.mxu0 0
        %669 = vmatpush1.bf16.msra.mxu0 %v646
        %670 = vmatprep.subr.bf16.mxu0 0
        %671 = vmatpush1.bf16.msra.mxu0 %v645
        %672 = vmatprep.subr.bf16.mxu0 0
        %673 = vmatpush2.bf16.msra.mxu0 0
        %674 = vmatprep.subr.bf16.mxu0 0
        %675 = vmatpush2.bf16.msra.mxu0 0
        %676 = vmatprep.subr.bf16.mxu0 0
        %677 = vmatpush2.bf16.msra.mxu0 0
        %678 = vmatprep.subr.bf16.mxu0 0
        %679 = vmatpush2.bf16.msra.mxu0 0
        %680 = vmatprep.subr.bf16.mxu0 0
        %681 = vmatpush2.bf16.msra.mxu0 0
        %682 = vmatprep.subr.bf16.mxu0 0
        %683 = vmatpush2.bf16.msra.mxu0 0
        %684 = vmatprep.subr.bf16.mxu0 0
        %685 = vmatpush2.bf16.msra.mxu0 0
        %686 = vmatprep.subr.bf16.mxu0 0
        %687 = vmatpush2.bf16.msra.mxu0 0
        %688 = vmatprep.mubr.bf16.mxu0 0
        %689 = vmatmul.mubr.bf16.gmra.mxu0 %v651
        %v690 = vpop.f32.mrf.mxu0
        %v691 = vadd.f32 0.0, %v690
        %v692 = vpop.f32.mrf.mxu0
        %v693 = vpop.f32.mrf.mxu0
        %v694 = vadd.f32 0.0, %v693
        %v695 = vpop.f32.mrf.mxu0
        %696 = vmatprep.mubr.bf16.mxu0 0
        %697 = vmatmul.mubr.bf16.gmra.mxu0 %v654
        %v698 = vpop.f32.mrf.mxu0
        %v699 = vadd.f32 0.0, %v698
        %v700 = vpop.f32.mrf.mxu0
        %v701 = vpop.f32.mrf.mxu0
        %v702 = vadd.f32 0.0, %v701
        %v703 = vpop.f32.mrf.mxu0
        %704 = vdwg.mxu0
        %v705 = vld [vmem:[%s451] sm:$0x1]
        %v706 = vadd.f32 %v705, 1.0
        %v708 = vlaneseq
        %v709 = vshrl.u32 %v708, 7
        %v710 = vsub.s32 0, %v709
        %v711 = vrot.slane %v706, %v710
        %v713 = vmul.f32 %v711, %v471
        %v714 = vmul.f32 %v711, %v472
        %v715 = vmul.f32 %v711, %v473
        %v716 = vmul.f32 %v711, %v474
        %v717 = vadd.f32 %v713, %v691
        %v718 = vadd.f32 %v714, %v694
        %v719 = vadd.f32 %v715, %v699
        %v720 = vadd.f32 %v716, %v702
        %v721 = vpack.c.bf16 %v718, %v717
        %v722 = vpack.c.bf16 %v720, %v719
        %v723 = vld [vmem:[%s391] sm:$0xf]
        %v724 = vld [vmem:[%s391 + $0x4] sm:$0xf]
        %v725 = vld [vmem:[%s391 + $0x8] sm:$0xf]
        %v726 = vld [vmem:[%s391 + $0xc] sm:$0xf]
        %v727 = vld [vmem:[%s391 + $0x10] sm:$0xf]
        %v728 = vld [vmem:[%s391 + $0x14] sm:$0xf]
        %v729 = vld [vmem:[%s391 + $0x18] sm:$0xf]
        %v730 = vld [vmem:[%s391 + $0x1c] sm:$0xf]
        %v731 = vld [vmem:[%s391 + $0x20] sm:$0xf]
        %v732 = vld [vmem:[%s391 + $0x24] sm:$0xf]
        %v733 = vld [vmem:[%s391 + $0x28] sm:$0xf]
        %v734 = vld [vmem:[%s391 + $0x2c] sm:$0xf]
        %v735 = vld [vmem:[%s391 + $0x30] sm:$0xf]
        %v736 = vld [vmem:[%s391 + $0x34] sm:$0xf]
        %v737 = vld [vmem:[%s391 + $0x38] sm:$0xf]
        %v738 = vld [vmem:[%s391 + $0x3c] sm:$0xf]
        %v739 = vld [vmem:[%s454] sm:$0x1]
        %v741 = vlaneseq
        %v742 = vshrl.u32 %v741, 7
        %v743 = vsub.s32 0, %v742
        %v744 = vrot.slane %v739, %v743
        %v762 = vunpack.c.l.b16 %v723
        %v763 = vunpack.c.l.b16 %v724
        %v764 = vunpack.c.l.b16 %v725
        %v765 = vunpack.c.l.b16 %v726
        %v766 = vunpack.c.l.b16 %v727
        %v767 = vunpack.c.l.b16 %v728
        %v768 = vunpack.c.l.b16 %v729
        %v769 = vunpack.c.l.b16 %v730
        %v770 = vunpack.c.l.b16 %v731
        %v771 = vunpack.c.l.b16 %v732
        %v772 = vunpack.c.l.b16 %v733
        %v773 = vunpack.c.l.b16 %v734
        %v774 = vunpack.c.l.b16 %v735
        %v775 = vunpack.c.l.b16 %v736
        %v776 = vunpack.c.l.b16 %v737
        %v777 = vunpack.c.l.b16 %v738
        %v778 = vpack.c.b16 %v763, %v762
        %v779 = vpack.c.b16 %v765, %v764
        %v780 = vpack.c.b16 %v767, %v766
        %v781 = vpack.c.b16 %v769, %v768
        %v782 = vpack.c.b16 %v771, %v770
        %v783 = vpack.c.b16 %v773, %v772
        %v784 = vpack.c.b16 %v775, %v774
        %v785 = vpack.c.b16 %v777, %v776
        %794 = vmatprep.subr.bf16.mxu0 0
        %795 = vmatpush1.bf16.msra.mxu0 %v785
        %796 = vmatprep.subr.bf16.mxu0 0
        %797 = vmatpush1.bf16.msra.mxu0 %v784
        %798 = vmatprep.subr.bf16.mxu0 0
        %799 = vmatpush1.bf16.msra.mxu0 %v783
        %800 = vmatprep.subr.bf16.mxu0 0
        %801 = vmatpush1.bf16.msra.mxu0 %v782
        %802 = vmatprep.subr.bf16.mxu0 0
        %803 = vmatpush1.bf16.msra.mxu0 %v781
        %804 = vmatprep.subr.bf16.mxu0 0
        %805 = vmatpush1.bf16.msra.mxu0 %v780
        %806 = vmatprep.subr.bf16.mxu0 0
        %807 = vmatpush1.bf16.msra.mxu0 %v779
        %808 = vmatprep.subr.bf16.mxu0 0
        %809 = vmatpush1.bf16.msra.mxu0 %v778
        %810 = vmatprep.subr.bf16.mxu0 0
        %811 = vmatpush2.bf16.msra.mxu0 0
        %812 = vmatprep.subr.bf16.mxu0 0
        %813 = vmatpush2.bf16.msra.mxu0 0
        %814 = vmatprep.subr.bf16.mxu0 0
        %815 = vmatpush2.bf16.msra.mxu0 0
        %816 = vmatprep.subr.bf16.mxu0 0
        %817 = vmatpush2.bf16.msra.mxu0 0
        %818 = vmatprep.subr.bf16.mxu0 0
        %819 = vmatpush2.bf16.msra.mxu0 0
        %820 = vmatprep.subr.bf16.mxu0 0
        %821 = vmatpush2.bf16.msra.mxu0 0
        %822 = vmatprep.subr.bf16.mxu0 0
        %823 = vmatpush2.bf16.msra.mxu0 0
        %824 = vmatprep.subr.bf16.mxu0 0
        %825 = vmatpush2.bf16.msra.mxu0 0
        %826 = vmatprep.mubr.bf16.mxu0 0
        %827 = vmatmul.mubr.bf16.gmra.mxu0 %v721
        %v828 = vpop.f32.mrf.mxu0
        %v829 = vadd.f32 %v744, %v828
        %v830 = vpop.f32.mrf.mxu0
        %v831 = vpop.f32.mrf.mxu0
        %v832 = vadd.f32 %v744, %v831
        %v833 = vpop.f32.mrf.mxu0
        %834 = vmatprep.mubr.bf16.mxu0 0
        %835 = vmatmul.mubr.bf16.gmra.mxu0 %v722
        %v836 = vpop.f32.mrf.mxu0
        %v837 = vadd.f32 %v744, %v836
        %v838 = vpop.f32.mrf.mxu0
        %v839 = vpop.f32.mrf.mxu0
        %v840 = vadd.f32 %v744, %v839
        %v841 = vpop.f32.mrf.mxu0
        %842 = vdwg.mxu0
        %v843 = vmax.f32 %v829, 0.0
        %v844 = vmax.f32 %v832, 0.0
        %v845 = vmax.f32 %v837, 0.0
        %v846 = vmax.f32 %v840, 0.0
        %v847 = vpack.c.bf16 %v844, %v843
        %v848 = vpack.c.bf16 %v846, %v845
        %v849 = vld [vmem:[%s400] sm:$0xf]
        %v850 = vld [vmem:[%s400 + $0x4] sm:$0xf]
        %v851 = vld [vmem:[%s400 + $0x8] sm:$0xf]
        %v852 = vld [vmem:[%s400 + $0xc] sm:$0xf]
        %v853 = vld [vmem:[%s400 + $0x10] sm:$0xf]
        %v854 = vld [vmem:[%s400 + $0x14] sm:$0xf]
        %v855 = vld [vmem:[%s400 + $0x18] sm:$0xf]
        %v856 = vld [vmem:[%s400 + $0x1c] sm:$0xf]
        %v857 = vld [vmem:[%s400 + $0x20] sm:$0xf]
        %v858 = vld [vmem:[%s400 + $0x24] sm:$0xf]
        %v859 = vld [vmem:[%s400 + $0x28] sm:$0xf]
        %v860 = vld [vmem:[%s400 + $0x2c] sm:$0xf]
        %v861 = vld [vmem:[%s400 + $0x30] sm:$0xf]
        %v862 = vld [vmem:[%s400 + $0x34] sm:$0xf]
        %v863 = vld [vmem:[%s400 + $0x38] sm:$0xf]
        %v864 = vld [vmem:[%s400 + $0x3c] sm:$0xf]
        %v865 = vld [vmem:[%s457] sm:$0x1]
        %v867 = vlaneseq
        %v868 = vshrl.u32 %v867, 7
        %v869 = vsub.s32 0, %v868
        %v870 = vrot.slane %v865, %v869
        %v888 = vunpack.c.l.b16 %v849
        %v889 = vunpack.c.l.b16 %v850
        %v890 = vunpack.c.l.b16 %v851
        %v891 = vunpack.c.l.b16 %v852
        %v892 = vunpack.c.l.b16 %v853
        %v893 = vunpack.c.l.b16 %v854
        %v894 = vunpack.c.l.b16 %v855
        %v895 = vunpack.c.l.b16 %v856
        %v896 = vunpack.c.l.b16 %v857
        %v897 = vunpack.c.l.b16 %v858
        %v898 = vunpack.c.l.b16 %v859
        %v899 = vunpack.c.l.b16 %v860
        %v900 = vunpack.c.l.b16 %v861
        %v901 = vunpack.c.l.b16 %v862
        %v902 = vunpack.c.l.b16 %v863
        %v903 = vunpack.c.l.b16 %v864
        %v904 = vpack.c.b16 %v889, %v888
        %v905 = vpack.c.b16 %v891, %v890
        %v906 = vpack.c.b16 %v893, %v892
        %v907 = vpack.c.b16 %v895, %v894
        %v908 = vpack.c.b16 %v897, %v896
        %v909 = vpack.c.b16 %v899, %v898
        %v910 = vpack.c.b16 %v901, %v900
        %v911 = vpack.c.b16 %v903, %v902
        %920 = vmatprep.subr.bf16.mxu0 0
        %921 = vmatpush1.bf16.msra.mxu0 %v911
        %922 = vmatprep.subr.bf16.mxu0 0
        %923 = vmatpush1.bf16.msra.mxu0 %v910
        %924 = vmatprep.subr.bf16.mxu0 0
        %925 = vmatpush1.bf16.msra.mxu0 %v909
        %926 = vmatprep.subr.bf16.mxu0 0
        %927 = vmatpush1.bf16.msra.mxu0 %v908
        %928 = vmatprep.subr.bf16.mxu0 0
        %929 = vmatpush1.bf16.msra.mxu0 %v907
        %930 = vmatprep.subr.bf16.mxu0 0
        %931 = vmatpush1.bf16.msra.mxu0 %v906
        %932 = vmatprep.subr.bf16.mxu0 0
        %933 = vmatpush1.bf16.msra.mxu0 %v905
        %934 = vmatprep.subr.bf16.mxu0 0
        %935 = vmatpush1.bf16.msra.mxu0 %v904
        %936 = vmatprep.subr.bf16.mxu0 0
        %937 = vmatpush2.bf16.msra.mxu0 0
        %938 = vmatprep.subr.bf16.mxu0 0
        %939 = vmatpush2.bf16.msra.mxu0 0
        %940 = vmatprep.subr.bf16.mxu0 0
        %941 = vmatpush2.bf16.msra.mxu0 0
        %942 = vmatprep.subr.bf16.mxu0 0
        %943 = vmatpush2.bf16.msra.mxu0 0
        %944 = vmatprep.subr.bf16.mxu0 0
        %945 = vmatpush2.bf16.msra.mxu0 0
        %946 = vmatprep.subr.bf16.mxu0 0
        %947 = vmatpush2.bf16.msra.mxu0 0
        %948 = vmatprep.subr.bf16.mxu0 0
        %949 = vmatpush2.bf16.msra.mxu0 0
        %950 = vmatprep.subr.bf16.mxu0 0
        %951 = vmatpush2.bf16.msra.mxu0 0
        %952 = vmatprep.mubr.bf16.mxu0 0
        %953 = vmatmul.mubr.bf16.gmra.mxu0 %v847
        %v954 = vpop.f32.mrf.mxu0
        %v955 = vadd.f32 %v870, %v954
        %v956 = vpop.f32.mrf.mxu0
        %v957 = vpop.f32.mrf.mxu0
        %v958 = vadd.f32 %v870, %v957
        %v959 = vpop.f32.mrf.mxu0
        %960 = vmatprep.mubr.bf16.mxu0 0
        %961 = vmatmul.mubr.bf16.gmra.mxu0 %v848
        %v962 = vpop.f32.mrf.mxu0
        %v963 = vadd.f32 %v870, %v962
        %v964 = vpop.f32.mrf.mxu0
        %v965 = vpop.f32.mrf.mxu0
        %v966 = vadd.f32 %v870, %v965
        %v967 = vpop.f32.mrf.mxu0
        %968 = vdwg.mxu0
        %p969 = scmp.lt.s32.totalorder %s27, 2
        // Predicated region
        $region73: #{tpu_custom_call.1} parent=55 // pred_check
          %p970 = pneg %p969
        $region74: #{tpu_custom_call.1} parent=55 // pred_check_branch
          %972 = sbr.rel (%p970) target = $region76
        $region75: #{tpu_custom_call.1} parent=55 // pred_region
          %v973 = vmax.f32 %v955, 0.0
          %v974 = vmax.f32 %v958, 0.0
          %v975 = vmax.f32 %v963, 0.0
          %v976 = vmax.f32 %v966, 0.0
          %977 = vst [vmem:[#allocation8] sm:$0xff] %v973
          %978 = vst [vmem:[#allocation8 + $0x8] sm:$0xff] %v974
          %979 = vst [vmem:[#allocation8 + $0x10] sm:$0xff] %v975
          %980 = vst [vmem:[#allocation8 + $0x18] sm:$0xff] %v976
        $region76: #{tpu_custom_call.1} parent=55 // pred_fallthru
          _
        %p981 = scmp.eq.s32.totalorder %s27, 2
        // Predicated region
        $region77: #{tpu_custom_call.1} parent=55 // pred_check
          %p982 = pneg %p981
        $region78: #{tpu_custom_call.1} parent=55 // pred_check_branch
          %984 = sbr.rel (%p982) target = $region80
        $region79: #{tpu_custom_call.1} parent=55 // pred_region
          %985 = vst [vmem:[#allocation8] sm:$0xff] %v955
          %986 = vst [vmem:[#allocation8 + $0x8] sm:$0xff] %v958
          %987 = vst [vmem:[#allocation8 + $0x10] sm:$0xff] %v963
          %988 = vst [vmem:[#allocation8 + $0x18] sm:$0xff] %v966
        $region80: #{tpu_custom_call.1} parent=55 // pred_fallthru
          _
        // Predicated region
        $region81: #{tpu_custom_call.1} parent=55 // pred_check
          %p989 = pneg %p259
        $region82: #{tpu_custom_call.1} parent=55 // pred_check_branch
          %991 = sbr.rel (%p989) target = $region84
        $region83: #{tpu_custom_call.1} parent=55 // pred_region
          %s993 = ssub.s32 512, 512
          %994 = vsyncadd [#allocation4], %s993
          %s995 = sshll.u32 [#allocation8], 4
          %s996 = int_to_ptr.vmem [resolvable:$true] %s995
          %1001 = dma.vmem_to_hbm [thread:$0]  %s996, 512, %s9, [#allocation4], 128, 128, 8
        $region84: #{tpu_custom_call.1} parent=55 // pred_fallthru
          _
        // Predicated region
        $region85: #{tpu_custom_call.1} parent=55 // pred_check
          %p1002 = pneg %p259
        $region86: #{tpu_custom_call.1} parent=55 // pred_check_branch
          %1004 = sbr.rel (%p1002) target = $region88
        $region87: #{tpu_custom_call.1} parent=55 // pred_region
          %1005 = dma.done [#allocation4], 512
        $region88: #{tpu_custom_call.1} parent=55 // pred_fallthru
          _
      $region56: #{tpu_custom_call.1} parent=5 // pred_fallthru
        _
      %p1006 = scmp.le.s32.totalorder 2, %s22
      // Predicated region
      $region89: #{tpu_custom_call.1} parent=5 // pred_check
        %p1007 = pneg %p1006
      $region90: #{tpu_custom_call.1} parent=5 // pred_check_branch
        %1009 = sbr.rel (%p1007) target = $region92
      $region91: #{tpu_custom_call.1} parent=5 // pred_region
        %s1010 = ssub.s32 %s22, 2
      $region92: #{tpu_custom_call.1} parent=5 // pred_fallthru
        _
    $region6: #{tpu_custom_call.1} parent=1 // loop_footer
      %s26 = sadd.s32 1, %s22
    $region7: #{tpu_custom_call.1} parent=1 // loop_footer_branch
      %21 = sbr.rel target = $region3
    $region8: #{tpu_custom_call.1} parent=1 // loop_exit
      _
    %1011 = vsyncpa [#allocation3], 1
    %s1012 = scalar_lea.sflag [#allocation3], 1
    %1013 = vsyncpa %s1012, 1
    %1014 = vsyncpa [#allocation6], 1
    %s1015 = scalar_lea.sflag [#allocation6], 1
    %1016 = vsyncpa %s1015, 1
    %1017 = vsyncpa [#allocation4], 1
    %s1018 = scalar_lea.sflag [#allocation4], 1
    %1019 = vsyncpa %s1018, 1

</llo_original>
